<compile_context>
chip_gen: v7x
topology: tpu7x:2x2x1
jax: 0.10.0
libtpu: 0.0.40
codegen_flags: <defaults>
</compile_context>

<pallas_src>
import math
import functools
from typing import NamedTuple

import jax
import jax.numpy as jnp
from jax import lax
from jax.experimental import pallas as pl
from jax.experimental.pallas import tpu as pltpu


def _round_up(a, b):
    return (a + b - 1) // b * b


# ----------------------------------------------------------------------------
# Kernel
# ----------------------------------------------------------------------------
def _lm_head_kernel(x_ref, w1_ref, ln_ref, w2_ref, b2_ref, o_ref, h_ref, *, eps):
    """One (row-tile, vocab-tile) grid step.

    j == 0 : dense -> erf-GELU -> LayerNorm in f32, cache bf16 result in h_ref.
    every j: decoder matmul on the cached activation + bias tile, store logits.
    """
    j = pl.program_id(1)

    @pl.when(j == 0)
    def _():
        # dense: [TM, F]bf16 @ [F, H]bf16 -> f32 accumulator
        h = jnp.dot(x_ref[...], w1_ref[...], preferred_element_type=jnp.float32)
        ln = ln_ref[...]                        # (3, H) f32: [dense_b; gamma; beta]
        h = h + ln[0:1, :]

        # exact (erf) GELU, matching BERT ACT2FN["gelu"], in f32
        inv_sqrt2 = jnp.float32(1.0 / math.sqrt(2.0))
        h = 0.5 * h * (1.0 + lax.erf(h * inv_sqrt2))

        # LayerNorm over hidden dim (last axis), f32 math
        mean = jnp.mean(h, axis=-1, keepdims=True)
        centered = h - mean
        var = jnp.mean(centered * centered, axis=-1, keepdims=True)
        h = centered * lax.rsqrt(var + jnp.float32(eps))
        h = h * ln[1:2, :] + ln[2:3, :]

        h_ref[...] = h.astype(h_ref.dtype)

    # decoder: [TM, H]bf16 @ [H, TN]bf16 -> f32 accumulator, + bias tile
    y = jnp.dot(h_ref[...], w2_ref[...], preferred_element_type=jnp.float32)
    y = y + b2_ref[...]
    o_ref[...] = y.astype(o_ref.dtype)


# ----------------------------------------------------------------------------
# One-time parameter preparation (hoisted out of the per-call path)
# ----------------------------------------------------------------------------
class HeadConfig(NamedTuple):
    field_hidden: int
    hidden: int
    vocab: int
    vocab_pad: int
    tile_n: int
    eps: float
    out_dtype: type


def prepare_lm_head_params(params, *, tile_n=1024, eps=1e-12,
                           out_dtype=jnp.bfloat16):
    """Cast weights to bf16, stack LN/bias params, pad vocab dim. Call once."""
    w1, b1 = params["dense_w"], params["dense_b"]
    gamma, beta = params["ln_gamma"], params["ln_beta"]
    w2, b2 = params["dec_w"], params["dec_b"]

    F, H = w1.shape
    V = w2.shape[1]
    TN = min(tile_n, _round_up(V, 128))
    V_pad = _round_up(V, TN)

    w1b = w1.astype(jnp.bfloat16)
    ln = jnp.stack([b1.astype(jnp.float32),
                    gamma.astype(jnp.float32),
                    beta.astype(jnp.float32)], axis=0)       # (3, H)
    w2b = w2.astype(jnp.bfloat16)
    b2f = b2.astype(jnp.float32)
    if V_pad != V:
        w2b = jnp.pad(w2b, ((0, 0), (0, V_pad - V)))
        b2f = jnp.pad(b2f, ((0, V_pad - V),))
    b2r = b2f.reshape(1, V_pad)

    prepared = {"w1": w1b, "ln": ln, "w2": w2b, "b2": b2r}
    cfg = HeadConfig(int(F), int(H), int(V), int(V_pad), int(TN),
                     float(eps), out_dtype)
    return prepared, cfg


# ----------------------------------------------------------------------------
# Tile / VMEM selection helpers
# ----------------------------------------------------------------------------
def _pick_row_tile(M, tile_m):
    """Row tile: multiple of 16 (bf16 packing), chosen via cdiv so the last
    tile isn't nearly empty, and split small problems into >=2 row tiles so the
    'parallel' row axis can use both v7x TensorCores."""
    M16 = _round_up(max(M, 16), 16)
    if M16 <= tile_m:
        if M16 >= 32:
            tm = _round_up(pl.cdiv(M16, 2), 16)
        else:
            tm = M16
    else:
        n_tiles = pl.cdiv(M16, tile_m)
        tm = _round_up(pl.cdiv(M16, n_tiles), 16)
    m_pad = _round_up(M16, tm)
    return tm, m_pad


def _vmem_limit_bytes(TM, TN, F, H, out_itemsize):
    try:
        cap = int(pltpu.get_tpu_info().vmem_capacity_bytes)
    except Exception:
        cap = 64 * 1024 * 1024          # v7x per-TC VMEM; conservative fallback
    need = (2 * (TM * F * 2            # x tile (bf16), double-buffered
                 + F * H * 2           # dense weight (bf16)
                 + 3 * H * 4           # [b1; gamma; beta] (f32)
                 + H * TN * 2          # decoder weight tile (bf16)
                 + TN * 4              # decoder bias tile (f32)
                 + TM * TN * out_itemsize)   # output tile
            + TM * H * 2               # cached post-LN activation scratch
            + (4 << 20))               # slack for compiler internals
    return int(min(max(need, 32 << 20), cap - (8 << 20)))


# ----------------------------------------------------------------------------
# Forward pass
# ----------------------------------------------------------------------------
@functools.partial(jax.jit, static_argnames=("cfg", "tile_m"))
def tabformer_lm_head(x, prepared, cfg, tile_m=1024):
    """x: [B, S, field_hidden] -> logits [B, S, vocab] in cfg.out_dtype."""
    B, S, F = x.shape
    assert F == cfg.field_hidden
    H, V, V_pad, TN = cfg.hidden, cfg.vocab, cfg.vocab_pad, cfg.tile_n
    M = B * S

    TM, M_pad = _pick_row_tile(M, tile_m)
    x2 = x.reshape(M, F).astype(jnp.bfloat16)
    if M_pad != M:
        x2 = jnp.pad(x2, ((0, M_pad - M), (0, 0)))

    out_itemsize = jnp.dtype(cfg.out_dtype).itemsize
    vmem_limit = _vmem_limit_bytes(TM, TN, F, H, out_itemsize)

    kernel = functools.partial(_lm_head_kernel, eps=cfg.eps)

    out = pl.pallas_call(
        kernel,
        out_shape=jax.ShapeDtypeStruct((M_pad, V_pad), cfg.out_dtype),
        grid_spec=pltpu.PrefetchScalarGridSpec(
            num_scalar_prefetch=0,
            grid=(M_pad // TM, V_pad // TN),
            in_specs=[
                pl.BlockSpec((TM, F), lambda i, j: (i, 0)),   # x rows (bf16)
                pl.BlockSpec((F, H), lambda i, j: (0, 0)),    # dense weight (bf16)
                pl.BlockSpec((3, H), lambda i, j: (0, 0)),    # [b1; gamma; beta] (f32)
                pl.BlockSpec((H, TN), lambda i, j: (0, j)),   # decoder weight tile (bf16)
                pl.BlockSpec((1, TN), lambda i, j: (0, j)),   # decoder bias tile (f32)
            ],
            out_specs=pl.BlockSpec((TM, TN), lambda i, j: (i, j)),
            scratch_shapes=[pltpu.VMEM((TM, H), jnp.bfloat16)],  # cached post-LN h
        ),
        compiler_params=pltpu.CompilerParams(
            dimension_semantics=("parallel", "arbitrary"),
            vmem_limit_bytes=vmem_limit),
    )(x2, prepared["w1"], prepared["ln"], prepared["w2"], prepared["b2"])

    return out[:M, :V].reshape(B, S, V)


# ----------------------------------------------------------------------------
# Pure-JAX reference (mirrors the kernel's bf16-matmul / f32-math mix)
# ----------------------------------------------------------------------------
def _reference(x, params, eps=1e-12):
    B, S, F = x.shape
    xb = x.reshape(B * S, F).astype(jnp.bfloat16)
    h = jnp.dot(xb, params["dense_w"].astype(jnp.bfloat16),
                preferred_element_type=jnp.float32)
    h = h + params["dense_b"].astype(jnp.float32)
    h = 0.5 * h * (1.0 + lax.erf(h * jnp.float32(1.0 / math.sqrt(2.0))))
    mean = jnp.mean(h, axis=-1, keepdims=True)
    centered = h - mean
    var = jnp.mean(centered * centered, axis=-1, keepdims=True)
    h = centered * lax.rsqrt(var + jnp.float32(eps))
    h = h * params["ln_gamma"] + params["ln_beta"]
    y = jnp.dot(h.astype(jnp.bfloat16), params["dec_w"].astype(jnp.bfloat16),
                preferred_element_type=jnp.float32)
    y = y + params["dec_b"]
    return y.reshape(B, S, -1)


if __name__ == "__main__":
    # Small config consistent with the module's __init__:
    #   field_hidden_size=32, hidden_size=64, vocab_size=128, batch=2, seq=8
    B, S = 2, 8
    FIELD_HIDDEN, HIDDEN, VOCAB = 32, 64, 128
    EPS = 1e-12

    key = jax.random.PRNGKey(0)
    kx, kw1, kb1, kw2 = jax.random.split(key, 4)

    x = jax.random.normal(kx, (B, S, FIELD_HIDDEN), dtype=jnp.float32)

    params = {
        # stored as [in, out] (transposed vs PyTorch nn.Linear weight)
        "dense_w": jax.random.normal(kw1, (FIELD_HIDDEN, HIDDEN), jnp.float32) * 0.02,
        "dense_b": jax.random.normal(kb1, (HIDDEN,), jnp.float32) * 0.02,
        "ln_gamma": jnp.ones((HIDDEN,), jnp.float32),
        "ln_beta": jnp.zeros((HIDDEN,), jnp.float32),
        "dec_w": jax.random.normal(kw2, (HIDDEN, VOCAB), jnp.float32) * 0.02,
        # decoder bias initialized to zeros, as in the module
        "dec_b": jnp.zeros((VOCAB,), jnp.float32),
    }

    # One-time weight prep (cast / stack / pad), hoisted out of the call path.
    prepared, cfg = prepare_lm_head_params(params, eps=EPS,
                                           out_dtype=jnp.bfloat16)

    out = tabformer_lm_head(x, prepared, cfg=cfg)
    out = jax.block_until_ready(out)

    ref = _reference(x, params, eps=EPS)
    assert out.shape == (B, S, VOCAB)
    assert jnp.allclose(out.astype(jnp.float32), ref, atol=2e-2, rtol=2e-2), \
        "mismatch vs JAX reference"

    print("KERNEL_OK")
</pallas_src>

<mosaic_0001>
module attributes {stable_mosaic.version = 11 : i64} {
  func.func @_lm_head_kernel(%arg0: i32, %arg1: i32, %arg2: memref<16x32xbf16, #tpu.memory_space<vmem>>, %arg3: memref<32x64xbf16, #tpu.memory_space<vmem>>, %arg4: memref<3x64xf32, #tpu.memory_space<vmem>>, %arg5: memref<64x128xbf16, #tpu.memory_space<vmem>>, %arg6: memref<1x128xf32, #tpu.memory_space<vmem>>, %arg7: memref<16x128xbf16, #tpu.memory_space<vmem>>, %arg8: memref<16x64xbf16, #tpu.memory_space<vmem>>) attributes {dimension_semantics = [#tpu.dimension_semantics<parallel>, #tpu.dimension_semantics<arbitrary>], iteration_bounds = array<i64: 1, 1>, scalar_prefetch = 0 : i64, scratch_operands = 1 : i64, tpu.core_type = #tpu.core_type<tc>, window_params = [{transform_indices = @transform_0, window_bounds = array<i64: 16, 32>}, {pipeline_mode = #tpu.pipeline_mode<synchronous>, transform_indices = @transform_1, window_bounds = array<i64: 32, 64>}, {pipeline_mode = #tpu.pipeline_mode<synchronous>, transform_indices = @transform_2, window_bounds = array<i64: 3, 64>}, {transform_indices = @transform_3, window_bounds = array<i64: 64, 128>}, {transform_indices = @transform_4, window_bounds = array<i64: 1, 128>}, {transform_indices = @transform_5, window_bounds = array<i64: 16, 128>}]} {
    %c0_i32 = arith.constant 0 : i32
    %0 = arith.cmpi eq, %arg1, %c0_i32 : i32
    %1 = arith.extui %0 : i1 to i32
    %c0_i32_0 = arith.constant 0 : i32
    %2 = arith.cmpi ne, %1, %c0_i32_0 : i32
    scf.if %2 {
      %c0_8 = arith.constant 0 : index
      %c0_9 = arith.constant 0 : index
      %11 = vector.load %arg2[%c0_8, %c0_9] : memref<16x32xbf16, #tpu.memory_space<vmem>>, vector<16x32xbf16>
      %c0_10 = arith.constant 0 : index
      %c0_11 = arith.constant 0 : index
      %12 = vector.load %arg3[%c0_10, %c0_11] : memref<32x64xbf16, #tpu.memory_space<vmem>>, vector<32x64xbf16>
      %cst_12 = arith.constant dense<0.000000e+00> : vector<16x64xf32>
      %13 = tpu.matmul %11, %12, %cst_12 {dimension_numbers = #tpu.dot_dimension_numbers<[1], [0], [0], [1], [0, 0, 1, 1], [], []>} : vector<16x32xbf16>, vector<32x64xbf16>, vector<16x64xf32> -> vector<16x64xf32>
      %c0_13 = arith.constant 0 : index
      %c0_14 = arith.constant 0 : index
      %14 = vector.load %arg4[%c0_13, %c0_14] : memref<3x64xf32, #tpu.memory_space<vmem>>, vector<3x64xf32>
      %15 = vector.extract_strided_slice %14 {offsets = [0, 0], sizes = [1, 64], strides = [1, 1]} : vector<3x64xf32> to vector<1x64xf32>
      %16 = vector.broadcast %15 : vector<1x64xf32> to vector<16x64xf32>
      %17 = arith.addf %13, %16 : vector<16x64xf32>
      %cst_15 = arith.constant 5.000000e-01 : f32
      %18 = vector.broadcast %cst_15 : f32 to vector<16x64xf32>
      %19 = arith.mulf %18, %17 : vector<16x64xf32>
      %cst_16 = arith.constant 0.707106769 : f32
      %20 = vector.broadcast %cst_16 : f32 to vector<16x64xf32>
      %21 = arith.mulf %17, %20 : vector<16x64xf32>
      %22 = math.erf %21 : vector<16x64xf32>
      %cst_17 = arith.constant 1.000000e+00 : f32
      %23 = vector.broadcast %cst_17 : f32 to vector<16x64xf32>
      %24 = arith.addf %23, %22 : vector<16x64xf32>
      %25 = arith.mulf %19, %24 : vector<16x64xf32>
      %cst_18 = arith.constant dense<0.000000e+00> : vector<16xf32>
      %26 = vector.multi_reduction <add>, %25, %cst_18 [1] : vector<16x64xf32> to vector<16xf32>
      %27 = vector.shape_cast %26 : vector<16xf32> to vector<16x1xf32>
      %cst_19 = arith.constant 6.400000e+01 : f32
      %28 = vector.broadcast %cst_19 : f32 to vector<16x1xf32>
      %29 = arith.divf %27, %28 : vector<16x1xf32>
      %30 = vector.broadcast %29 : vector<16x1xf32> to vector<16x64xf32>
      %31 = arith.subf %25, %30 : vector<16x64xf32>
      %32 = arith.mulf %31, %31 : vector<16x64xf32>
      %cst_20 = arith.constant dense<0.000000e+00> : vector<16xf32>
      %33 = vector.multi_reduction <add>, %32, %cst_20 [1] : vector<16x64xf32> to vector<16xf32>
      %34 = vector.shape_cast %33 : vector<16xf32> to vector<16x1xf32>
      %cst_21 = arith.constant 6.400000e+01 : f32
      %35 = vector.broadcast %cst_21 : f32 to vector<16x1xf32>
      %36 = arith.divf %34, %35 : vector<16x1xf32>
      %cst_22 = arith.constant 9.99999996E-13 : f32
      %37 = vector.broadcast %cst_22 : f32 to vector<16x1xf32>
      %38 = arith.addf %36, %37 : vector<16x1xf32>
      %39 = math.rsqrt %38 : vector<16x1xf32>
      %40 = vector.broadcast %39 : vector<16x1xf32> to vector<16x64xf32>
      %41 = arith.mulf %31, %40 : vector<16x64xf32>
      %42 = vector.extract_strided_slice %14 {offsets = [1, 0], sizes = [1, 64], strides = [1, 1]} : vector<3x64xf32> to vector<1x64xf32>
      %43 = vector.broadcast %42 : vector<1x64xf32> to vector<16x64xf32>
      %44 = arith.mulf %41, %43 : vector<16x64xf32>
      %45 = vector.extract_strided_slice %14 {offsets = [2, 0], sizes = [1, 64], strides = [1, 1]} : vector<3x64xf32> to vector<1x64xf32>
      %46 = vector.broadcast %45 : vector<1x64xf32> to vector<16x64xf32>
      %47 = arith.addf %44, %46 : vector<16x64xf32>
      %48 = arith.truncf %47 : vector<16x64xf32> to vector<16x64xbf16>
      %c0_23 = arith.constant 0 : index
      %c0_24 = arith.constant 0 : index
      %49 = vector.load %arg8[%c0_23, %c0_24] : memref<16x64xbf16, #tpu.memory_space<vmem>>, vector<16x64xbf16>
      tpu.vector_store %arg8[%c0_23, %c0_24], %48 {strides = array<i32>} : memref<16x64xbf16, #tpu.memory_space<vmem>>, vector<16x64xbf16>,
    } else {
    }
    %c0 = arith.constant 0 : index
    %c0_1 = arith.constant 0 : index
    %3 = vector.load %arg8[%c0, %c0_1] : memref<16x64xbf16, #tpu.memory_space<vmem>>, vector<16x64xbf16>
    %c0_2 = arith.constant 0 : index
    %c0_3 = arith.constant 0 : index
    %4 = vector.load %arg5[%c0_2, %c0_3] : memref<64x128xbf16, #tpu.memory_space<vmem>>, vector<64x128xbf16>
    %cst = arith.constant dense<0.000000e+00> : vector<16x128xf32>
    %5 = tpu.matmul %3, %4, %cst {dimension_numbers = #tpu.dot_dimension_numbers<[1], [0], [0], [1], [0, 0, 1, 1], [], []>} : vector<16x64xbf16>, vector<64x128xbf16>, vector<16x128xf32> -> vector<16x128xf32>
    %c0_4 = arith.constant 0 : index
    %c0_5 = arith.constant 0 : index
    %6 = vector.load %arg6[%c0_4, %c0_5] : memref<1x128xf32, #tpu.memory_space<vmem>>, vector<1x128xf32>
    %7 = vector.broadcast %6 : vector<1x128xf32> to vector<16x128xf32>
    %8 = arith.addf %5, %7 : vector<16x128xf32>
    %9 = arith.truncf %8 : vector<16x128xf32> to vector<16x128xbf16>
    %c0_6 = arith.constant 0 : index
    %c0_7 = arith.constant 0 : index
    %10 = vector.load %arg7[%c0_6, %c0_7] : memref<16x128xbf16, #tpu.memory_space<vmem>>, vector<16x128xbf16>
    tpu.vector_store %arg7[%c0_6, %c0_7], %9 {strides = array<i32>} : memref<16x128xbf16, #tpu.memory_space<vmem>>, vector<16x128xbf16>,
    return
  }
  func.func @transform_0(%arg0: i32, %arg1: i32) -> (i32, i32) {
    %c0_i32 = arith.constant 0 : i32
    %c0_i32_0 = arith.constant 0 : i32
    return %arg0, %c0_i32 : i32, i32
  }
  func.func @transform_1(%arg0: i32, %arg1: i32) -> (i32, i32) {
    %c0_i32 = arith.constant 0 : i32
    %c0_i32_0 = arith.constant 0 : i32
    %c0_i32_1 = arith.constant 0 : i32
    return %c0_i32, %c0_i32_0 : i32, i32
  }
  func.func @transform_2(%arg0: i32, %arg1: i32) -> (i32, i32) {
    %c0_i32 = arith.constant 0 : i32
    %c0_i32_0 = arith.constant 0 : i32
    %c0_i32_1 = arith.constant 0 : i32
    return %c0_i32, %c0_i32_0 : i32, i32
  }
  func.func @transform_3(%arg0: i32, %arg1: i32) -> (i32, i32) {
    %c0_i32 = arith.constant 0 : i32
    %c0_i32_0 = arith.constant 0 : i32
    return %c0_i32, %arg1 : i32, i32
  }
  func.func @transform_4(%arg0: i32, %arg1: i32) -> (i32, i32) {
    %c0_i32 = arith.constant 0 : i32
    %c0_i32_0 = arith.constant 0 : i32
    return %c0_i32, %arg1 : i32, i32
  }
  func.func @transform_5(%arg0: i32, %arg1: i32) -> (i32, i32) {
    %c0_i32 = arith.constant 0 : i32
    return %arg0, %arg1 : i32, i32
  }
}

</mosaic_0001>

<llo_original>
// kernel: tabformer_lm_head.1
$region0: #{tabformer_lm_head.1}
  #allocation0 [shape = 'u32[]', space=smem, size = 0x4, offset = 0x4, fixed_abs, tag = 'smem constant byte address 0x4 - core index']
  #allocation1 [shape = 'u32[144,128]{1,0:T(1,128)}', space=vmem, size = 0x12000, scoped, tag = 'internal scratch']
  #allocation2 [shape = 'bf16[16,64]{1,0:T(16,128)(2,1)}', space=vmem, size = 0x1000, scoped, tag = 'scratch operand']
  %s0 = inlined_call_operand.vmem [shape: bf16[16,32], index: 0, kind: input, shape index: {}]
  %s1 = inlined_call_operand.hbm [shape: bf16[32,64], index: 1, kind: input, shape index: {}]
  %s2 = inlined_call_operand.vmem [shape: f32[3,64], index: 2, kind: input, shape index: {}]
  %s3 = inlined_call_operand.vmem [shape: bf16[64,128], index: 3, kind: input, shape index: {}]
  %s4 = inlined_call_operand.vmem [shape: f32[1,128], index: 4, kind: input, shape index: {}]
  %s5 = inlined_call_operand.hbm [shape: bf16[16,128], index: 5, kind: output, shape index: {}]
  %s6 = sld [smem:[#allocation0]]
  $region38: #{tabformer_lm_head.1} parent=0
    _
  %s8 = ssub.s32 1, %s6
  %s9 = scalar_select 0, %s8, %s6
  $region1: #{tabformer_lm_head.1} parent=0
    #allocation3 [shape = 'u8[8192]{0}', space=vmem, size = 0x2000, scoped, tag = 'input window, operand 1, single buffered']
    #allocation4 [shape = 's32[1]{0}', space=sflag, size = 0x4, scoped, tag = 'scoped memory for tabformer_lm_head.1']
    #allocation5 [shape = 's32[1]{0}', space=sflag, size = 0x4, scoped, tag = 'scoped memory for tabformer_lm_head.1']
    #allocation6 [shape = 'u8[4096]{0}', space=vmem, size = 0x1000, scoped, tag = 'output window, operand 0, single buffered']
    %10 = vsyncpa [#allocation4], 0
    %11 = vsyncpa [#allocation5], 0
    // Predicated region
    $region2: #{tabformer_lm_head.1} parent=1 // pred_check
      _
    $region3: #{tabformer_lm_head.1} parent=1 // pred_check_branch
      %13 = sbr.rel (0) target = $region5
    $region4: #{tabformer_lm_head.1} parent=1 // pred_region
      _
    $region5: #{tabformer_lm_head.1} parent=1 // pred_fallthru
      _
    // Predicated region
    $region6: #{tabformer_lm_head.1} parent=1 // pred_check
      _
    $region7: #{tabformer_lm_head.1} parent=1 // pred_check_branch
      %15 = sbr.rel (0) target = $region9
    $region8: #{tabformer_lm_head.1} parent=1 // pred_region
      %s17 = ssub.s32 256, 256
      %18 = vsyncadd [#allocation4], %s17
      %s19 = sshll.u32 [#allocation3], 4
      %s20 = int_to_ptr.vmem [resolvable:$true] %s19
      %25 = dma.hbm_to_vmem [thread:$0]  %s1, 256, %s20, [#allocation4], 64, 64, 4
    $region9: #{tabformer_lm_head.1} parent=1 // pred_fallthru
      _
    // Predicated region
    $region10: #{tabformer_lm_head.1} parent=1 // pred_check
      _
    $region11: #{tabformer_lm_head.1} parent=1 // pred_check_branch
      %27 = sbr.rel (0) target = $region13
    $region12: #{tabformer_lm_head.1} parent=1 // pred_region
      _
    $region13: #{tabformer_lm_head.1} parent=1 // pred_fallthru
      _
    // Predicated region
    $region14: #{tabformer_lm_head.1} parent=1 // pred_check
      _
    $region15: #{tabformer_lm_head.1} parent=1 // pred_check_branch
      %29 = sbr.rel (0) target = $region17
    $region16: #{tabformer_lm_head.1} parent=1 // pred_region
      _
    $region17: #{tabformer_lm_head.1} parent=1 // pred_fallthru
      _
    // Predicated region
    $region18: #{tabformer_lm_head.1} parent=1 // pred_check
      _
    $region19: #{tabformer_lm_head.1} parent=1 // pred_check_branch
      %31 = sbr.rel (0) target = $region21
    $region20: #{tabformer_lm_head.1} parent=1 // pred_region
      _
    $region21: #{tabformer_lm_head.1} parent=1 // pred_fallthru
      _
    // Predicated region
    $region22: #{tabformer_lm_head.1} parent=1 // pred_check
      _
    $region23: #{tabformer_lm_head.1} parent=1 // pred_check_branch
      %33 = sbr.rel (0) target = $region25
    $region24: #{tabformer_lm_head.1} parent=1 // pred_region
      %34 = dma.done [#allocation4], 256
    $region25: #{tabformer_lm_head.1} parent=1 // pred_fallthru
      _
    %p36 = scmp.eq.s32.totalorder 0, 0
    // Predicated region
    $region26: #{tabformer_lm_head.1} parent=1 // pred_check
      %p37 = pneg %p36
    $region27: #{tabformer_lm_head.1} parent=1 // pred_check_branch
      %39 = sbr.rel (%p37) target = $region29
    $region28: #{tabformer_lm_head.1} parent=1 // pred_region
      %v40 = vld [vmem:[%s0] sm:$0xf]
      %v41 = vld [vmem:[%s0 + $0x4] sm:$0xf]
      %v42 = vld [vmem:[#allocation3] sm:$0xf]
      %v43 = vld [vmem:[#allocation3 + $0x4] sm:$0xf]
      %v44 = vld [vmem:[#allocation3 + $0x8] sm:$0xf]
      %v45 = vld [vmem:[#allocation3 + $0xc] sm:$0xf]
      %v46 = vld [vmem:[%s2] sm:$0x7]
      %v47 = vlaneseq
      %v48 = vshrl.u32 %v47, 7
      %v49 = vsub.s32 0, %v48
      %v50 = vrot.slane %v46, %v49
      %v53 = vunpack.c.l.b16 %v40
      %v54 = vunpack.c.l.b16 %v41
      %v55 = vpack.c.b16 %v54, %v53
      %v60 = vunpack.c.l.b16 %v42
      %v61 = vunpack.c.l.b16 %v43
      %v62 = vunpack.c.l.b16 %v44
      %v63 = vunpack.c.l.b16 %v45
      %v64 = vpack.c.b16 %v61, %v60
      %v65 = vpack.c.b16 %v63, %v62
      %vm68 = vcmask 261120
      %v70 = vsel %vm68, %v55, 0
      %72 = vmatprep.subr.bf16.mxu0 0
      %73 = vmatpush1.bf16.msra.mxu0 %v64
      %74 = vmatprep.subr.bf16.mxu0 0
      %75 = vmatpush1.bf16.msra.mxu0 %v65
      %76 = vmatprep.subr.bf16.mxu0 0
      %77 = vmatpush1.bf16.msra.mxu0 0
      %78 = vmatprep.subr.bf16.mxu0 0
      %79 = vmatpush1.bf16.msra.mxu0 0
      %80 = vmatprep.subr.bf16.mxu0 0
      %81 = vmatpush1.bf16.msra.mxu0 0
      %82 = vmatprep.subr.bf16.mxu0 0
      %83 = vmatpush1.bf16.msra.mxu0 0
      %84 = vmatprep.subr.bf16.mxu0 0
      %85 = vmatpush1.bf16.msra.mxu0 0
      %86 = vmatprep.subr.bf16.mxu0 0
      %87 = vmatpush1.bf16.msra.mxu0 0
      %88 = vmatprep.subr.bf16.mxu0 0
      %89 = vmatpush1.bf16.msra.mxu0 0
      %90 = vmatprep.subr.bf16.mxu0 0
      %91 = vmatpush1.bf16.msra.mxu0 0
      %92 = vmatprep.subr.bf16.mxu0 0
      %93 = vmatpush1.bf16.msra.mxu0 0
      %94 = vmatprep.subr.bf16.mxu0 0
      %95 = vmatpush1.bf16.msra.mxu0 0
      %96 = vmatprep.subr.bf16.mxu0 0
      %97 = vmatpush1.bf16.msra.mxu0 0
      %98 = vmatprep.subr.bf16.mxu0 0
      %99 = vmatpush1.bf16.msra.mxu0 0
      %100 = vmatprep.subr.bf16.mxu0 0
      %101 = vmatpush1.bf16.msra.mxu0 0
      %102 = vmatprep.subr.bf16.mxu0 0
      %103 = vmatpush1.bf16.msra.mxu0 0
      %104 = vmatprep.mubr.bf16.mxu0 0
      %105 = vmatmul.mubr.bf16.gmra.mrb[0].mxu0 %v70
      %v106 = vpop.f32.mrb[0].mxu0
      %v107 = vadd.f32 %v50, %v106
      %v108 = vpop.f32.mrb[0].mxu0
      %v109 = vpop.f32.mrb[0].mxu0
      %v110 = vadd.f32 %v50, %v109
      %v111 = vpop.f32.mrb[0].mxu0
      %112 = vdwg.mxu0
      %v113 = vmul.f32 %v107, 0.5
      %v114 = vmul.f32 %v110, 0.5
      %v115 = vmul.f32 %v107, 0.70710677
      %v116 = vmul.f32 %v110, 0.70710677
      %v117 = verf.f32.pop %v115
      %v118 = verf.f32.pop %v116
      %v119 = vadd.f32 %v117, 1.0
      %v120 = vadd.f32 %v118, 1.0
      %v121 = vmul.f32 %v113, %v119
      %v122 = vmul.f32 %v114, %v120
      %vm123 = vcmask 523264
      %v124 = vsel %vm123, %v121, 0.0
      %125 = vadd.xlane.f32.xlu0 %v124
      %v126 = vpop.xlane.xlu0 %125
      %v127 = vsel %vm123, %v122, 0.0
      %128 = vadd.xlane.f32.xlu0 %v127
      %v129 = vpop.xlane.xlu0 %128
      %v130 = vrcp.pop 64.0
      %v131 = vmul.f32 %v126, %v130
      %v132 = vmul.f32 %v129, %v130
      %v133 = vsub.f32 %v121, %v131
      %v134 = vsub.f32 %v122, %v132
      %v135 = vmul.f32 %v133, %v133
      %v136 = vmul.f32 %v134, %v134
      %v137 = vsel %vm123, %v135, 0.0
      %138 = vadd.xlane.f32.xlu0 %v137
      %v139 = vpop.xlane.xlu0 %138
      %v140 = vsel %vm123, %v136, 0.0
      %141 = vadd.xlane.f32.xlu0 %v140
      %v142 = vpop.xlane.xlu0 %141
      %v143 = vmul.f32 %v139, %v130
      %v144 = vmul.f32 %v142, %v130
      %v145 = vadd.f32 %v143, 1e-12
      %v146 = vadd.f32 %v144, 1e-12
      %v147 = vrsqrt.pop %v145
      %v148 = vrsqrt.pop %v146
      %v149 = vmul.f32 %v133, %v147
      %v150 = vmul.f32 %v134, %v148
      %v151 = vlaneseq
      %v152 = vshrl.u32 %v151, 7
      %v153 = vsub.s32 1, %v152
      %v154 = vrot.slane %v46, %v153
      %v155 = vmul.f32 %v149, %v154
      %v156 = vmul.f32 %v150, %v154
      %v157 = vlaneseq
      %v158 = vshrl.u32 %v157, 7
      %v159 = vsub.s32 2, %v158
      %v160 = vrot.slane %v46, %v159
      %v161 = vadd.f32 %v155, %v160
      %v162 = vadd.f32 %v156, %v160
      %v163 = vpack.c.bf16 %v162, %v161
      %164 = vst.msk [vmem:[#allocation2] sm:$0xff] %vm123, %v163
    $region29: #{tabformer_lm_head.1} parent=1 // pred_fallthru
      _
    %v165 = vld [vmem:[#allocation2] sm:$0xff]
    %v166 = vld [vmem:[%s3] sm:$0xf]
    %v167 = vld [vmem:[%s3 + $0x4] sm:$0xf]
    %v168 = vld [vmem:[%s3 + $0x8] sm:$0xf]
    %v169 = vld [vmem:[%s3 + $0xc] sm:$0xf]
    %v170 = vld [vmem:[%s3 + $0x10] sm:$0xf]
    %v171 = vld [vmem:[%s3 + $0x14] sm:$0xf]
    %v172 = vld [vmem:[%s3 + $0x18] sm:$0xf]
    %v173 = vld [vmem:[%s3 + $0x1c] sm:$0xf]
    %v174 = vld [vmem:[%s4] sm:$0x1]
    %v176 = vlaneseq
    %v177 = vshrl.u32 %v176, 7
    %v178 = vsub.s32 0, %v177
    %v179 = vrot.slane %v174, %v178
    %v189 = vunpack.c.l.b16 %v166
    %v190 = vunpack.c.l.b16 %v167
    %v191 = vunpack.c.l.b16 %v168
    %v192 = vunpack.c.l.b16 %v169
    %v193 = vunpack.c.l.b16 %v170
    %v194 = vunpack.c.l.b16 %v171
    %v195 = vunpack.c.l.b16 %v172
    %v196 = vunpack.c.l.b16 %v173
    %v197 = vpack.c.b16 %v190, %v189
    %v198 = vpack.c.b16 %v192, %v191
    %v199 = vpack.c.b16 %v194, %v193
    %v200 = vpack.c.b16 %v196, %v195
    %vm205 = vcmask 523264
    %v207 = vsel %vm205, %v165, 0
    %209 = vmatprep.subr.bf16.mxu0 0
    %210 = vmatpush1.bf16.msra.mxu0 %v197
    %211 = vmatprep.subr.bf16.mxu0 0
    %212 = vmatpush1.bf16.msra.mxu0 %v198
    %213 = vmatprep.subr.bf16.mxu0 0
    %214 = vmatpush1.bf16.msra.mxu0 %v199
    %215 = vmatprep.subr.bf16.mxu0 0
    %216 = vmatpush1.bf16.msra.mxu0 %v200
    %217 = vmatprep.subr.bf16.mxu0 0
    %218 = vmatpush1.bf16.msra.mxu0 0
    %219 = vmatprep.subr.bf16.mxu0 0
    %220 = vmatpush1.bf16.msra.mxu0 0
    %221 = vmatprep.subr.bf16.mxu0 0
    %222 = vmatpush1.bf16.msra.mxu0 0
    %223 = vmatprep.subr.bf16.mxu0 0
    %224 = vmatpush1.bf16.msra.mxu0 0
    %225 = vmatprep.subr.bf16.mxu0 0
    %226 = vmatpush1.bf16.msra.mxu0 0
    %227 = vmatprep.subr.bf16.mxu0 0
    %228 = vmatpush1.bf16.msra.mxu0 0
    %229 = vmatprep.subr.bf16.mxu0 0
    %230 = vmatpush1.bf16.msra.mxu0 0
    %231 = vmatprep.subr.bf16.mxu0 0
    %232 = vmatpush1.bf16.msra.mxu0 0
    %233 = vmatprep.subr.bf16.mxu0 0
    %234 = vmatpush1.bf16.msra.mxu0 0
    %235 = vmatprep.subr.bf16.mxu0 0
    %236 = vmatpush1.bf16.msra.mxu0 0
    %237 = vmatprep.subr.bf16.mxu0 0
    %238 = vmatpush1.bf16.msra.mxu0 0
    %239 = vmatprep.subr.bf16.mxu0 0
    %240 = vmatpush1.bf16.msra.mxu0 0
    %241 = vmatprep.mubr.bf16.mxu0 0
    %242 = vmatmul.mubr.bf16.gmra.mrb[0].mxu0 %v207
    %v243 = vpop.f32.mrb[0].mxu0
    %v244 = vadd.f32 %v179, %v243
    %v245 = vpop.f32.mrb[0].mxu0
    %v246 = vpop.f32.mrb[0].mxu0
    %v247 = vadd.f32 %v179, %v246
    %v248 = vpop.f32.mrb[0].mxu0
    %249 = vdwg.mxu0
    %v250 = vpack.c.bf16 %v247, %v244
    %v252 = vunpack.c.l.b16 %v250
    %v253 = vunpack.c.h.b16 %v250
    %v254 = vpack.c.b16 %v252, %v252
    %v255 = vpack.c.b16 %v253, %v253
    %258 = vst [vmem:[#allocation6] sm:$0xf] %v254
    %259 = vst [vmem:[#allocation6 + $0x4] sm:$0xf] %v255
    // Predicated region
    $region30: #{tabformer_lm_head.1} parent=1 // pred_check
      _
    $region31: #{tabformer_lm_head.1} parent=1 // pred_check_branch
      %261 = sbr.rel (0) target = $region33
    $region32: #{tabformer_lm_head.1} parent=1 // pred_region
      %s263 = ssub.s32 128, 128
      %264 = vsyncadd [#allocation5], %s263
      %s265 = sshll.u32 [#allocation6], 4
      %s266 = int_to_ptr.vmem [resolvable:$true] %s265
      %271 = dma.vmem_to_hbm [thread:$0]  %s266, 128, %s5, [#allocation5], 64, 64, 4
    $region33: #{tabformer_lm_head.1} parent=1 // pred_fallthru
      _
    // Predicated region
    $region34: #{tabformer_lm_head.1} parent=1 // pred_check
      _
    $region35: #{tabformer_lm_head.1} parent=1 // pred_check_branch
      %273 = sbr.rel (0) target = $region37
    $region36: #{tabformer_lm_head.1} parent=1 // pred_region
      %274 = dma.done [#allocation5], 128
    $region37: #{tabformer_lm_head.1} parent=1 // pred_fallthru
      _
    %275 = vsyncpa [#allocation4], 1
    %276 = vsyncpa [#allocation5], 1

</llo_original>
